<compile_context>
chip_gen: v7x
topology: tpu7x:2x2x1
jax: 0.10.0
libtpu: 0.0.40
codegen_flags: <defaults>
</compile_context>

<pallas_src>
import functools
import math

import jax
import jax.numpy as jnp
from jax.experimental import pallas as pl
from jax.experimental.pallas import tpu as pltpu


def _cdiv(a, b):
    return -(-a // b)


def _rup(a, b):
    return _cdiv(a, b) * b


def _sgc_kernel(x_ref, coord_ref, wx_ref, wc_ref, b_ref, o_ref, *,
                cout, val_off, cin, use_mxu, nonlinearity):
    """Fused 1x1 gated conv for one (spatial-tile, batch) block.

    x_ref:     (1, Cin, T)  input feature tile (channel rows, spatial lanes)
    coord_ref: (2, T)       normalized (grid_x, grid_y) coordinate tile
    wx_ref:    (R, Cin)     stacked [gate; value] weights for the x channels
    wc_ref:    (R, 2)       stacked [gate; value] weights for the coord channels
    b_ref:     (R, 1)       stacked [gate; value] biases (f32)
    o_ref:     (1, Cout, T) output tile
    R = round_up(Cout, 8) + Cout; value rows start at sublane-aligned val_off.
    """
    x = x_ref[0]                 # (Cin, T)
    coord = coord_ref[...]       # (2, T)
    wc = wc_ref[...]             # (R, 2) f32

    # Coord contribution as two VPU broadcast FMAs; a K=2 MXU matmul is <2%
    # utilization and a second serialized MXU push/pop on the critical path.
    pre = (b_ref[...]
           + wc[:, 0:1] * coord[0:1, :].astype(jnp.float32)
           + wc[:, 1:2] * coord[1:2, :].astype(jnp.float32))     # (R, T) f32

    if use_mxu:
        # MXU path (weights already stored in the matmul dtype, f32 accumulate).
        pre = pre + jnp.dot(wx_ref[...], x.astype(wx_ref.dtype),
                            preferred_element_type=jnp.float32)
    else:
        # Tiny channel count: Cin broadcast FMAs beat an MXU pass (mem-bound).
        wx = wx_ref[...]
        for c in range(cin):
            pre = pre + (wx[:, c:c + 1].astype(jnp.float32)
                         * x[c:c + 1, :].astype(jnp.float32))

    gate = jax.nn.sigmoid(pre[:cout])                 # (Cout, T)
    values = pre[val_off:val_off + cout]              # (Cout, T) aligned slice
    out = gate * values
    if nonlinearity is not None:                      # fused: free VPU/EUP filler
        out = nonlinearity(out)
    o_ref[0] = out.astype(o_ref.dtype)


def spatial_gated_conv2d(x, wg, bg, wv, bv, nonlinearity=None, *,
                         allow_bf16_matmul=True):
    """x: (N, Cin, H, W). wg/wv: (Cout, Cin+2) 1x1-conv weights. bg/bv: (Cout,).

    When allow_bf16_matmul and Cin,Cout >= 32 (f32 inputs), the x-channel
    matmul runs in bf16 with f32 accumulation (MXU-native on v5e/v6e/v7x).
    """
    # TODO(synk): only kernel_size=1 / stride=1 / dilation=1 (the module
    # defaults) is implemented; a k>1 spatial convolution is not translated.
    N, Cin, H, W = x.shape
    Cout, cin2 = wg.shape
    assert cin2 == Cin + 2 and wv.shape == (Cout, Cin + 2)
    assert bg.shape == (Cout,) and bv.shape == (Cout,)
    HW = H * W
    dtype = x.dtype
    itemsize = jnp.dtype(dtype).itemsize

    # --- VMEM budget from the actual chip (v7x: 64 MiB/TC, v5e/v6e: 128 MiB).
    try:
        vmem_cap = int(pltpu.get_tpu_info().vmem_capacity_bytes)
    except Exception:
        vmem_cap = 64 * 1024 * 1024          # conservative (v7x per-TC)
    vmem_limit = min(int(vmem_cap * 0.6), 96 * 1024 * 1024)
    block_budget = int(vmem_limit * 0.8)     # leave headroom for Mosaic scratch

    # --- Spatial tiling: lane-dense (multiple of 128), footprint-bounded,
    #     capped at 8192 lanes so the pipeline has steps to hide DMA behind.
    sub_io = 16 if itemsize == 2 else 8      # sublane packing of x/out/coord
    bytes_per_col = 2 * (_rup(Cin, sub_io) + _rup(Cout, sub_io) + sub_io) * itemsize
    max_cols = max(128, (block_budget // bytes_per_col) // 128 * 128)
    tile_hw = min(_rup(HW, 128), max_cols, 8192)
    hw_pad = _rup(HW, tile_hw)
    grid_hw = hw_pad // tile_hw

    # v7x megacore: keep the total parallel grid extent even when cheap.
    if (grid_hw * N) % 2 == 1:
        tile2 = _rup(_cdiv(HW, grid_hw + 1), 128)
        if tile2 >= 128:
            grid2 = _rup(HW, tile2) // tile2
            if grid2 != grid_hw and (grid2 * N) % 2 == 0:
                tile_hw, hw_pad, grid_hw = tile2, _rup(HW, tile2), grid2

    # --- Coordinate channels (grid_x, grid_y): one (2, HW) side input shared
    #     across the batch.  Guard W==1 / H==1 (avoid divide-by-zero).
    gy, gx = jnp.meshgrid(jnp.arange(H, dtype=jnp.float32),
                          jnp.arange(W, dtype=jnp.float32), indexing="ij")
    gx = gx / max(W - 1, 1)
    gy = gy / max(H - 1, 1)
    coord = jnp.stack([gx.reshape(HW), gy.reshape(HW)], axis=0).astype(dtype)

    x_flat = x.reshape(N, Cin, HW)
    padded = hw_pad != HW
    if padded:
        # TODO(synk): handle only the ragged last tile (masked store) instead
        # of a whole-tensor pad/slice round trip.
        x_flat = jnp.pad(x_flat, ((0, 0), (0, 0), (0, hw_pad - HW)))
        coord = jnp.pad(coord, ((0, 0), (0, hw_pad - HW)))

    # --- Weight prep: stack [gate; value] with the value half starting at a
    #     sublane-aligned row so the in-kernel split is a free view.
    use_mxu = Cin > 8
    mm_dtype = dtype
    if (use_mxu and allow_bf16_matmul and dtype == jnp.float32
            and Cin >= 32 and Cout >= 32):
        mm_dtype = jnp.bfloat16              # bf16 operands, f32 accumulation
    SUB_ACC = 8                              # f32 accumulator sublane group
    cg = _rup(Cout, SUB_ACC)                 # value rows start here
    rows = cg + Cout

    wx = jnp.zeros((rows, Cin), mm_dtype)
    wx = wx.at[:Cout].set(wg[:, :Cin].astype(mm_dtype))
    wx = wx.at[cg:].set(wv[:, :Cin].astype(mm_dtype))
    wc = jnp.zeros((rows, 2), jnp.float32)
    wc = wc.at[:Cout].set(wg[:, Cin:].astype(jnp.float32))
    wc = wc.at[cg:].set(wv[:, Cin:].astype(jnp.float32))
    bb = jnp.zeros((rows, 1), jnp.float32)
    bb = bb.at[:Cout, 0].set(bg.astype(jnp.float32))
    bb = bb.at[cg:, 0].set(bv.astype(jnp.float32))

    cols = N * hw_pad
    cost = pl.CostEstimate(
        flops=int((4 * (Cin + 2) + 1) * Cout * cols),
        transcendentals=int(Cout * cols),
        bytes_accessed=int((Cin + Cout) * cols * itemsize
                           + 2 * hw_pad * itemsize),   # coord fetched once/tile
    )

    kernel = functools.partial(
        _sgc_kernel, cout=Cout, val_off=cg, cin=Cin,
        use_mxu=use_mxu, nonlinearity=nonlinearity)

    out_flat = pl.pallas_call(
        kernel,
        out_shape=jax.ShapeDtypeStruct((N, Cout, hw_pad), dtype),
        grid_spec=pltpu.PrefetchScalarGridSpec(
            num_scalar_prefetch=0,
            # Spatial tile outer, batch inner: coord block index depends only
            # on the outer axis, so it is not re-DMA'd for every batch step.
            grid=(grid_hw, N),
            in_specs=[
                pl.BlockSpec((1, Cin, tile_hw), lambda t, b: (b, 0, t)),
                pl.BlockSpec((2, tile_hw), lambda t, b: (0, t)),
                pl.BlockSpec((rows, Cin), lambda t, b: (0, 0)),
                pl.BlockSpec((rows, 2), lambda t, b: (0, 0)),
                pl.BlockSpec((rows, 1), lambda t, b: (0, 0)),
            ],
            out_specs=pl.BlockSpec((1, Cout, tile_hw), lambda t, b: (b, 0, t)),
        ),
        compiler_params=pltpu.CompilerParams(
            dimension_semantics=("parallel", "parallel"),
            vmem_limit_bytes=vmem_limit,
        ),
        cost_estimate=cost,
    )(x_flat, coord, wx, wc, bb)

    out = out_flat[:, :, :HW] if padded else out_flat
    return out.reshape(N, Cout, H, W)


def spatial_gated_conv2d_ref(x, wg, bg, wv, bv, nonlinearity=None):
    """Pure-JAX reference matching the PyTorch forward pass (kernel_size=1)."""
    N, Cin, H, W = x.shape
    gy, gx = jnp.meshgrid(jnp.arange(H, dtype=jnp.float32),
                          jnp.arange(W, dtype=jnp.float32), indexing="ij")
    gx = gx / max(W - 1, 1)
    gy = gy / max(H - 1, 1)
    coord = jnp.broadcast_to(jnp.stack([gx, gy], axis=0)[None],
                             (N, 2, H, W)).astype(x.dtype)
    xc = jnp.concatenate([x, coord], axis=1)                     # (N, Cin+2, H, W)
    gate = jax.nn.sigmoid(jnp.einsum("oc,nchw->nohw", wg, xc)
                          + bg[None, :, None, None])
    values = jnp.einsum("oc,nchw->nohw", wv, xc) + bv[None, :, None, None]
    out = gate * values
    if nonlinearity is not None:
        out = nonlinearity(out)
    return out


if __name__ == "__main__":
    # Shapes implied by the module defaults: x NCHW, in_channels=4,
    # out_channels=4, kernel_size=1 (so the convs are 1x1), 16x16 spatial.
    N, Cin, Cout, H, W = 2, 4, 4, 16, 16

    key = jax.random.PRNGKey(0)
    kx, k1, k2, k3, k4 = jax.random.split(key, 5)

    x = jax.random.normal(kx, (N, Cin, H, W), dtype=jnp.float32)

    # Deterministic parameter init (PyTorch Conv2d-style uniform bounds,
    # fan_in = (Cin + 2) * k * k with k = 1).
    fan_in = Cin + 2
    bound = 1.0 / math.sqrt(fan_in)
    wg = jax.random.uniform(k1, (Cout, Cin + 2), jnp.float32, -bound, bound)
    bg = jax.random.uniform(k2, (Cout,), jnp.float32, -bound, bound)
    wv = jax.random.uniform(k3, (Cout, Cin + 2), jnp.float32, -bound, bound)
    bv = jax.random.uniform(k4, (Cout,), jnp.float32, -bound, bound)

    out = jax.block_until_ready(spatial_gated_conv2d(x, wg, bg, wv, bv))
    ref = spatial_gated_conv2d_ref(x, wg, bg, wv, bv)
    assert out.shape == (N, Cout, H, W)
    assert jnp.allclose(out, ref, atol=1e-5, rtol=1e-5)

    # Fused-nonlinearity path.
    out_nl = jax.block_until_ready(
        spatial_gated_conv2d(x, wg, bg, wv, bv, nonlinearity=jax.nn.relu))
    ref_nl = spatial_gated_conv2d_ref(x, wg, bg, wv, bv, nonlinearity=jax.nn.relu)
    assert jnp.allclose(out_nl, ref_nl, atol=1e-5, rtol=1e-5)

    print("KERNEL_OK")
</pallas_src>

<mosaic_0001>
module attributes {stable_mosaic.version = 11 : i64} {
  func.func @_sgc_kernel(%arg0: i32, %arg1: i32, %arg2: memref<1x4x256xf32, #tpu.memory_space<vmem>>, %arg3: memref<2x256xf32, #tpu.memory_space<vmem>>, %arg4: memref<12x4xf32, #tpu.memory_space<vmem>>, %arg5: memref<12x2xf32, #tpu.memory_space<vmem>>, %arg6: memref<12x1xf32, #tpu.memory_space<vmem>>, %arg7: memref<1x4x256xf32, #tpu.memory_space<vmem>>) attributes {dimension_semantics = [#tpu.dimension_semantics<parallel>, #tpu.dimension_semantics<parallel>], iteration_bounds = array<i64: 1, 2>, scalar_prefetch = 0 : i64, scratch_operands = 0 : i64, tpu.core_type = #tpu.core_type<tc>, window_params = [{transform_indices = @transform_0, window_bounds = array<i64: 1, 4, 256>}, {transform_indices = @transform_1, window_bounds = array<i64: 2, 256>}, {pipeline_mode = #tpu.pipeline_mode<synchronous>, transform_indices = @transform_2, window_bounds = array<i64: 12, 4>}, {pipeline_mode = #tpu.pipeline_mode<synchronous>, transform_indices = @transform_3, window_bounds = array<i64: 12, 2>}, {pipeline_mode = #tpu.pipeline_mode<synchronous>, transform_indices = @transform_4, window_bounds = array<i64: 12, 1>}, {transform_indices = @transform_5, window_bounds = array<i64: 1, 4, 256>}]} {
    %c0 = arith.constant 0 : index
    %c0_0 = arith.constant 0 : index
    %c0_1 = arith.constant 0 : index
    %0 = vector.load %arg2[%c0, %c0_0, %c0_1] : memref<1x4x256xf32, #tpu.memory_space<vmem>>, vector<1x4x256xf32>
    %1 = vector.shape_cast %0 : vector<1x4x256xf32> to vector<4x256xf32>
    %c0_2 = arith.constant 0 : index
    %c0_3 = arith.constant 0 : index
    %2 = vector.load %arg3[%c0_2, %c0_3] : memref<2x256xf32, #tpu.memory_space<vmem>>, vector<2x256xf32>
    %c0_4 = arith.constant 0 : index
    %c0_5 = arith.constant 0 : index
    %3 = vector.load %arg5[%c0_4, %c0_5] : memref<12x2xf32, #tpu.memory_space<vmem>>, vector<12x2xf32>
    %c0_6 = arith.constant 0 : index
    %c0_7 = arith.constant 0 : index
    %4 = vector.load %arg6[%c0_6, %c0_7] : memref<12x1xf32, #tpu.memory_space<vmem>>, vector<12x1xf32>
    %5 = vector.extract_strided_slice %3 {offsets = [0, 0], sizes = [12, 1], strides = [1, 1]} : vector<12x2xf32> to vector<12x1xf32>
    %6 = vector.extract_strided_slice %2 {offsets = [0, 0], sizes = [1, 256], strides = [1, 1]} : vector<2x256xf32> to vector<1x256xf32>
    %7 = vector.broadcast %5 : vector<12x1xf32> to vector<12x256xf32>
    %8 = vector.broadcast %6 : vector<1x256xf32> to vector<12x256xf32>
    %9 = arith.mulf %7, %8 : vector<12x256xf32>
    %10 = vector.broadcast %4 : vector<12x1xf32> to vector<12x256xf32>
    %11 = arith.addf %10, %9 : vector<12x256xf32>
    %12 = vector.extract_strided_slice %3 {offsets = [0, 1], sizes = [12, 1], strides = [1, 1]} : vector<12x2xf32> to vector<12x1xf32>
    %13 = vector.extract_strided_slice %2 {offsets = [1, 0], sizes = [1, 256], strides = [1, 1]} : vector<2x256xf32> to vector<1x256xf32>
    %14 = vector.broadcast %12 : vector<12x1xf32> to vector<12x256xf32>
    %15 = vector.broadcast %13 : vector<1x256xf32> to vector<12x256xf32>
    %16 = arith.mulf %14, %15 : vector<12x256xf32>
    %17 = arith.addf %11, %16 : vector<12x256xf32>
    %c0_8 = arith.constant 0 : index
    %c0_9 = arith.constant 0 : index
    %18 = vector.load %arg4[%c0_8, %c0_9] : memref<12x4xf32, #tpu.memory_space<vmem>>, vector<12x4xf32>
    %19 = vector.extract_strided_slice %18 {offsets = [0, 0], sizes = [12, 1], strides = [1, 1]} : vector<12x4xf32> to vector<12x1xf32>
    %20 = vector.extract_strided_slice %1 {offsets = [0, 0], sizes = [1, 256], strides = [1, 1]} : vector<4x256xf32> to vector<1x256xf32>
    %21 = vector.broadcast %19 : vector<12x1xf32> to vector<12x256xf32>
    %22 = vector.broadcast %20 : vector<1x256xf32> to vector<12x256xf32>
    %23 = arith.mulf %21, %22 : vector<12x256xf32>
    %24 = arith.addf %17, %23 : vector<12x256xf32>
    %25 = vector.extract_strided_slice %18 {offsets = [0, 1], sizes = [12, 1], strides = [1, 1]} : vector<12x4xf32> to vector<12x1xf32>
    %26 = vector.extract_strided_slice %1 {offsets = [1, 0], sizes = [1, 256], strides = [1, 1]} : vector<4x256xf32> to vector<1x256xf32>
    %27 = vector.broadcast %25 : vector<12x1xf32> to vector<12x256xf32>
    %28 = vector.broadcast %26 : vector<1x256xf32> to vector<12x256xf32>
    %29 = arith.mulf %27, %28 : vector<12x256xf32>
    %30 = arith.addf %24, %29 : vector<12x256xf32>
    %31 = vector.extract_strided_slice %18 {offsets = [0, 2], sizes = [12, 1], strides = [1, 1]} : vector<12x4xf32> to vector<12x1xf32>
    %32 = vector.extract_strided_slice %1 {offsets = [2, 0], sizes = [1, 256], strides = [1, 1]} : vector<4x256xf32> to vector<1x256xf32>
    %33 = vector.broadcast %31 : vector<12x1xf32> to vector<12x256xf32>
    %34 = vector.broadcast %32 : vector<1x256xf32> to vector<12x256xf32>
    %35 = arith.mulf %33, %34 : vector<12x256xf32>
    %36 = arith.addf %30, %35 : vector<12x256xf32>
    %37 = vector.extract_strided_slice %18 {offsets = [0, 3], sizes = [12, 1], strides = [1, 1]} : vector<12x4xf32> to vector<12x1xf32>
    %38 = vector.extract_strided_slice %1 {offsets = [3, 0], sizes = [1, 256], strides = [1, 1]} : vector<4x256xf32> to vector<1x256xf32>
    %39 = vector.broadcast %37 : vector<12x1xf32> to vector<12x256xf32>
    %40 = vector.broadcast %38 : vector<1x256xf32> to vector<12x256xf32>
    %41 = arith.mulf %39, %40 : vector<12x256xf32>
    %42 = arith.addf %36, %41 : vector<12x256xf32>
    %43 = vector.extract_strided_slice %42 {offsets = [0, 0], sizes = [4, 256], strides = [1, 1]} : vector<12x256xf32> to vector<4x256xf32>
    %44 = arith.negf %43 : vector<4x256xf32>
    %45 = math.exp %44 : vector<4x256xf32>
    %cst = arith.constant 1.000000e+00 : f32
    %46 = vector.broadcast %cst : f32 to vector<4x256xf32>
    %47 = arith.addf %46, %45 : vector<4x256xf32>
    %48 = arith.divf %46, %47 : vector<4x256xf32>
    %49 = vector.extract_strided_slice %42 {offsets = [8, 0], sizes = [4, 256], strides = [1, 1]} : vector<12x256xf32> to vector<4x256xf32>
    %50 = arith.mulf %48, %49 : vector<4x256xf32>
    %c0_10 = arith.constant 0 : index
    %c0_11 = arith.constant 0 : index
    %c0_12 = arith.constant 0 : index
    %51 = vector.load %arg7[%c0_10, %c0_11, %c0_12] : memref<1x4x256xf32, #tpu.memory_space<vmem>>, vector<1x4x256xf32>
    %52 = vector.shape_cast %51 : vector<1x4x256xf32> to vector<4x256xf32>
    %53 = vector.shape_cast %50 : vector<4x256xf32> to vector<1x4x256xf32>
    tpu.vector_store %arg7[%c0_10, %c0_11, %c0_12], %53 {strides = array<i32>} : memref<1x4x256xf32, #tpu.memory_space<vmem>>, vector<1x4x256xf32>,
    return
  }
  func.func @transform_0(%arg0: i32, %arg1: i32) -> (i32, i32, i32) {
    %c0_i32 = arith.constant 0 : i32
    %c0_i32_0 = arith.constant 0 : i32
    return %arg1, %c0_i32, %arg0 : i32, i32, i32
  }
  func.func @transform_1(%arg0: i32, %arg1: i32) -> (i32, i32) {
    %c0_i32 = arith.constant 0 : i32
    %c0_i32_0 = arith.constant 0 : i32
    return %c0_i32, %arg0 : i32, i32
  }
  func.func @transform_2(%arg0: i32, %arg1: i32) -> (i32, i32) {
    %c0_i32 = arith.constant 0 : i32
    %c0_i32_0 = arith.constant 0 : i32
    %c0_i32_1 = arith.constant 0 : i32
    return %c0_i32, %c0_i32_0 : i32, i32
  }
  func.func @transform_3(%arg0: i32, %arg1: i32) -> (i32, i32) {
    %c0_i32 = arith.constant 0 : i32
    %c0_i32_0 = arith.constant 0 : i32
    %c0_i32_1 = arith.constant 0 : i32
    return %c0_i32, %c0_i32_0 : i32, i32
  }
  func.func @transform_4(%arg0: i32, %arg1: i32) -> (i32, i32) {
    %c0_i32 = arith.constant 0 : i32
    %c0_i32_0 = arith.constant 0 : i32
    %c0_i32_1 = arith.constant 0 : i32
    return %c0_i32, %c0_i32_0 : i32, i32
  }
  func.func @transform_5(%arg0: i32, %arg1: i32) -> (i32, i32, i32) {
    %c0_i32 = arith.constant 0 : i32
    %c0_i32_0 = arith.constant 0 : i32
    return %arg1, %c0_i32, %arg0 : i32, i32, i32
  }
}

</mosaic_0001>

<llo_original>
// kernel: tpu_custom_call.1
$region0: #{tpu_custom_call.1}
  #allocation0 [shape = 'u32[]', space=smem, size = 0x4, offset = 0x4, fixed_abs, tag = 'smem constant byte address 0x4 - core index']
  #allocation1 [shape = 'u32[144,128]{1,0:T(1,128)}', space=vmem, size = 0x12000, scoped, tag = 'internal scratch']
  %s0 = inlined_call_operand.vmem [shape: f32[2,4,256], index: 0, kind: input, shape index: {}]
  %s1 = inlined_call_operand.vmem [shape: f32[2,256], index: 1, kind: input, shape index: {}]
  %s2 = inlined_call_operand.vmem [shape: f32[12,4], index: 2, kind: input, shape index: {}]
  %s3 = inlined_call_operand.vmem [shape: f32[12,2], index: 3, kind: input, shape index: {}]
  %s4 = inlined_call_operand.vmem [shape: f32[12,1], index: 4, kind: input, shape index: {}]
  %s5 = inlined_call_operand.hbm [shape: f32[2,4,256], index: 5, kind: output, shape index: {}]
  %s6 = sld [smem:[#allocation0]]
  $region53: #{tpu_custom_call.1} parent=0
    _
  %s8 = ssub.s32 1, %s6
  %s9 = scalar_select 0, %s8, %s6
  $region1: #{tpu_custom_call.1} parent=0
    #allocation2 [shape = 'u8[8192]{0}', space=vmem, size = 0x2000, scoped, tag = 'output window, operand 0']
    #allocation3 [shape = 's32[2]{0}', space=sflag, size = 0x8, scoped, tag = 'scoped memory for tpu_custom_call.1']
    %10 = vsyncpa [#allocation3], 0
    %s11 = scalar_lea.sflag [#allocation3], 1
    %12 = vsyncpa %s11, 0
    loop: start=0, step=1, limit=4
    $region2: #{tpu_custom_call.1} parent=1 // loop_pre_header
      _
    $region3: #{tpu_custom_call.1} parent=1 // loop_header
      %s14 = sphi 0, %s18
      %p15 = scmp.ge.s32.totalorder %s14, 4
      %s21 = sphi 0, %s33
      %s22 = sphi 0, %s29
      %s23 = sphi 0, %s21
      %s24 = sphi 0, %s22
      %s25 = sphi 0, %s23
      %s26 = sphi 0, %s24
      %s38 = sphi 0, %s40
      %s41 = sphi 0, %s38
      %s42 = sphi 0, %s41
      %s58 = sphi 0, %s42
      %s64 = sphi 0, %s66
      %s67 = sphi 0, %s64
      %s68 = sphi 0, %s67
      %s84 = sphi 0, %s68
      %s88 = sphi 0, %s88
      %s90 = sphi 0, %s88
      %s91 = sphi 0, %s90
      %s105 = sphi 0, %s91
      %s109 = sphi 0, %s109
      %s111 = sphi 0, %s109
      %s112 = sphi 0, %s111
      %s126 = sphi 0, %s112
      %s130 = sphi 0, %s130
      %s132 = sphi 0, %s130
      %s133 = sphi 0, %s132
      %s147 = sphi 0, %s133
      %s155 = sphi 0, %s157
      %s158 = sphi 0, %s155
      %s159 = sphi 0, %s158
      %s175 = sphi 0, %s159
    $region4: #{tpu_custom_call.1} parent=1 // loop_header_branch
      %17 = sbr.rel (%p15) target = $region8
    $region5: #{tpu_custom_call.1} parent=1 // loop_body
      %s19 = ssub.s32 %s14, 1
      %s20 = ssub.s32 %s14, 2
      %s27 = sadd.s32 1, %s22
      %p28 = scmp.ge.s32.totalorder %s27, 2
      %s29 = scalar_select %p28, 0, %s27
      %s30 = sadd.s32 1, %s21
      %s31 = scalar_select %p28, %s30, %s21
      %p32 = scmp.ge.s32.totalorder %s31, 1
      %s33 = scalar_select %p32, 0, %s31
      %s34 = ssub.s32 %s22, %s29
      %s35 = ssub.s32 %s21, %s33
      %s36 = sor.u32 %s34, %s35
      %p37 = scmp.eq.s32.totalorder %s36, 0
      %s39 = sadd.s32 %s38, 1
      %s40 = scalar_select %p37, %s38, %s39
      %p43 = pneg %p37
      %p44 = scmp.eq.s32.totalorder %s14, 1
      %p45 = por %p43, %p44
      %p46 = scmp.ne.s32.totalorder %s38, %s41
      %p47 = scmp.eq.s32.totalorder %s14, 0
      %p48 = por %p46, %p47
      %p49 = scmp.ne.s32.totalorder %s38, %s41
      %p50 = scmp.eq.s32.totalorder %s19, 1
      %p51 = por %p49, %p50
      %p52 = scmp.ne.s32.totalorder %s41, %s42
      %p53 = scmp.eq.s32.totalorder %s19, 0
      %p54 = por %p52, %p53
      %p55 = scmp.ne.s32.totalorder %s41, %s42
      %p56 = scmp.eq.s32.totalorder %s20, 1
      %p57 = por %p55, %p56
      %p59 = scmp.ne.s32.totalorder %s42, %s58
      %p60 = scmp.eq.s32.totalorder %s20, 0
      %p61 = por %p59, %p60
      %s62 = ssub.s32 %s21, %s33
      %p63 = scmp.eq.s32.totalorder %s62, 0
      %s65 = sadd.s32 %s64, 1
      %s66 = scalar_select %p63, %s64, %s65
      %p69 = pneg %p63
      %p70 = scmp.eq.s32.totalorder %s14, 1
      %p71 = por %p69, %p70
      %p72 = scmp.ne.s32.totalorder %s64, %s67
      %p73 = scmp.eq.s32.totalorder %s14, 0
      %p74 = por %p72, %p73
      %p75 = scmp.ne.s32.totalorder %s64, %s67
      %p76 = scmp.eq.s32.totalorder %s19, 1
      %p77 = por %p75, %p76
      %p78 = scmp.ne.s32.totalorder %s67, %s68
      %p79 = scmp.eq.s32.totalorder %s19, 0
      %p80 = por %p78, %p79
      %p81 = scmp.ne.s32.totalorder %s67, %s68
      %p82 = scmp.eq.s32.totalorder %s20, 1
      %p83 = por %p81, %p82
      %p85 = scmp.ne.s32.totalorder %s68, %s84
      %p86 = scmp.eq.s32.totalorder %s20, 0
      %p87 = por %p85, %p86
      %s89 = sadd.s32 %s88, 1
      %p92 = scmp.eq.s32.totalorder %s14, 1
      %p93 = scmp.ne.s32.totalorder %s88, %s90
      %p94 = scmp.eq.s32.totalorder %s14, 0
      %p95 = por %p93, %p94
      %p96 = scmp.ne.s32.totalorder %s88, %s90
      %p97 = scmp.eq.s32.totalorder %s19, 1
      %p98 = por %p96, %p97
      %p99 = scmp.ne.s32.totalorder %s90, %s91
      %p100 = scmp.eq.s32.totalorder %s19, 0
      %p101 = por %p99, %p100
      %p102 = scmp.ne.s32.totalorder %s90, %s91
      %p103 = scmp.eq.s32.totalorder %s20, 1
      %p104 = por %p102, %p103
      %p106 = scmp.ne.s32.totalorder %s91, %s105
      %p107 = scmp.eq.s32.totalorder %s20, 0
      %p108 = por %p106, %p107
      %s110 = sadd.s32 %s109, 1
      %p113 = scmp.eq.s32.totalorder %s14, 1
      %p114 = scmp.ne.s32.totalorder %s109, %s111
      %p115 = scmp.eq.s32.totalorder %s14, 0
      %p116 = por %p114, %p115
      %p117 = scmp.ne.s32.totalorder %s109, %s111
      %p118 = scmp.eq.s32.totalorder %s19, 1
      %p119 = por %p117, %p118
      %p120 = scmp.ne.s32.totalorder %s111, %s112
      %p121 = scmp.eq.s32.totalorder %s19, 0
      %p122 = por %p120, %p121
      %p123 = scmp.ne.s32.totalorder %s111, %s112
      %p124 = scmp.eq.s32.totalorder %s20, 1
      %p125 = por %p123, %p124
      %p127 = scmp.ne.s32.totalorder %s112, %s126
      %p128 = scmp.eq.s32.totalorder %s20, 0
      %p129 = por %p127, %p128
      %s131 = sadd.s32 %s130, 1
      %p134 = scmp.eq.s32.totalorder %s14, 1
      %p135 = scmp.ne.s32.totalorder %s130, %s132
      %p136 = scmp.eq.s32.totalorder %s14, 0
      %p137 = por %p135, %p136
      %p138 = scmp.ne.s32.totalorder %s130, %s132
      %p139 = scmp.eq.s32.totalorder %s19, 1
      %p140 = por %p138, %p139
      %p141 = scmp.ne.s32.totalorder %s132, %s133
      %p142 = scmp.eq.s32.totalorder %s19, 0
      %p143 = por %p141, %p142
      %p144 = scmp.ne.s32.totalorder %s132, %s133
      %p145 = scmp.eq.s32.totalorder %s20, 1
      %p146 = por %p144, %p145
      %p148 = scmp.ne.s32.totalorder %s133, %s147
      %p149 = scmp.eq.s32.totalorder %s20, 0
      %p150 = por %p148, %p149
      %s151 = ssub.s32 %s22, %s29
      %s152 = ssub.s32 %s21, %s33
      %s153 = sor.u32 %s151, %s152
      %p154 = scmp.eq.s32.totalorder %s153, 0
      %s156 = sadd.s32 %s155, 1
      %s157 = scalar_select %p154, %s155, %s156
      %p160 = pneg %p154
      %p161 = scmp.eq.s32.totalorder %s14, 1
      %p162 = por %p160, %p161
      %p163 = scmp.ne.s32.totalorder %s155, %s158
      %p164 = scmp.eq.s32.totalorder %s14, 0
      %p165 = por %p163, %p164
      %p166 = scmp.ne.s32.totalorder %s155, %s158
      %p167 = scmp.eq.s32.totalorder %s19, 1
      %p168 = por %p166, %p167
      %p169 = scmp.ne.s32.totalorder %s158, %s159
      %p170 = scmp.eq.s32.totalorder %s19, 0
      %p171 = por %p169, %p170
      %p172 = scmp.ne.s32.totalorder %s158, %s159
      %p173 = scmp.eq.s32.totalorder %s20, 1
      %p174 = por %p172, %p173
      %p176 = scmp.ne.s32.totalorder %s159, %s175
      %p177 = scmp.eq.s32.totalorder %s20, 0
      %p178 = por %p176, %p177
      %p179 = scmp.le.s32.totalorder 1, %s14
      %p180 = scmp.lt.s32.totalorder %s14, 3
      %p181 = pnand %p179, %p180
      %p182 = pneg %p181
      // Predicated region
      $region9: #{tpu_custom_call.1} parent=5 // pred_check
        _
      $region10: #{tpu_custom_call.1} parent=5 // pred_check_branch
        %184 = sbr.rel (%p181) target = $region12
      $region11: #{tpu_custom_call.1} parent=5 // pred_region
        %s185 = ssub.s32 %s14, 1
        // Predicated region
        $region13: #{tpu_custom_call.1} parent=11 // pred_check
          %p186 = pneg %p80
        $region14: #{tpu_custom_call.1} parent=11 // pred_check_branch
          %188 = sbr.rel (%p186) target = $region16
        $region15: #{tpu_custom_call.1} parent=11 // pred_region
          %s189 = smul.u32 2, %s23
          %p190 = scmp.lt.s32.totalorder %s189, 1
          %s191 = scalar_select %p190, %s189, 1
          %s192 = smul.addr %s191, 2
          %s193 = scalar_lea.vmem %s1, %s192
          %s194 = smul.u32 2, %s23
        $region16: #{tpu_custom_call.1} parent=11 // pred_fallthru
          _
        // Predicated region
        $region17: #{tpu_custom_call.1} parent=11 // pred_check
          %p195 = pneg %p101
        $region18: #{tpu_custom_call.1} parent=11 // pred_check_branch
          %197 = sbr.rel (%p195) target = $region20
        $region19: #{tpu_custom_call.1} parent=11 // pred_region
          _
        $region20: #{tpu_custom_call.1} parent=11 // pred_fallthru
          _
        // Predicated region
        $region21: #{tpu_custom_call.1} parent=11 // pred_check
          %p198 = pneg %p122
        $region22: #{tpu_custom_call.1} parent=11 // pred_check_branch
          %200 = sbr.rel (%p198) target = $region24
        $region23: #{tpu_custom_call.1} parent=11 // pred_region
          _
        $region24: #{tpu_custom_call.1} parent=11 // pred_fallthru
          _
        // Predicated region
        $region25: #{tpu_custom_call.1} parent=11 // pred_check
          %p201 = pneg %p143
        $region26: #{tpu_custom_call.1} parent=11 // pred_check_branch
          %203 = sbr.rel (%p201) target = $region28
        $region27: #{tpu_custom_call.1} parent=11 // pred_region
          _
        $region28: #{tpu_custom_call.1} parent=11 // pred_fallthru
          _
      $region12: #{tpu_custom_call.1} parent=5 // pred_fallthru
        _
      %p204 = scmp.lt.s32.totalorder %s14, 2
      // Predicated region
      $region29: #{tpu_custom_call.1} parent=5 // pred_check
        %p205 = pneg %p204
      $region30: #{tpu_custom_call.1} parent=5 // pred_check_branch
        %207 = sbr.rel (%p205) target = $region32
      $region31: #{tpu_custom_call.1} parent=5 // pred_region
        // Predicated region
        $region33: #{tpu_custom_call.1} parent=31 // pred_check
          %p208 = pneg %p48
        $region34: #{tpu_custom_call.1} parent=31 // pred_check_branch
          %210 = sbr.rel (%p208) target = $region36
        $region35: #{tpu_custom_call.1} parent=31 // pred_region
          %s211 = smul.u32 2, %s21
          %p212 = scmp.lt.s32.totalorder %s22, 1
          %s213 = scalar_select %p212, %s22, 1
          %p214 = scmp.lt.s32.totalorder %s211, 1
          %s215 = scalar_select %p214, %s211, 1
          %s216 = smul.addr %s213, 2
          %s217 = sadd.s32 %s215, %s216
          %s218 = smul.addr %s217, 4
          %s219 = scalar_lea.vmem %s0, %s218
          %s220 = smul.u32 2, %s21
        $region36: #{tpu_custom_call.1} parent=31 // pred_fallthru
          _
      $region32: #{tpu_custom_call.1} parent=5 // pred_fallthru
        _
      %p221 = scmp.le.s32.totalorder 1, %s14
      %p222 = scmp.lt.s32.totalorder %s14, 3
      %p223 = pnand %p221, %p222
      %p224 = pneg %p223
      // Predicated region
      $region37: #{tpu_custom_call.1} parent=5 // pred_check
        _
      $region38: #{tpu_custom_call.1} parent=5 // pred_check_branch
        %226 = sbr.rel (%p223) target = $region40
      $region39: #{tpu_custom_call.1} parent=5 // pred_region
        %s227 = ssub.s32 %s14, 1
        %s228 = smul.u32 2, %s23
        %p229 = scmp.lt.s32.totalorder %s24, 1
        %s230 = scalar_select %p229, %s24, 1
        %p231 = scmp.lt.s32.totalorder %s228, 1
        %s232 = scalar_select %p231, %s228, 1
        %s233 = smul.addr %s230, 2
        %s234 = sadd.s32 %s232, %s233
        %s235 = smul.addr %s234, 4
        %s236 = scalar_lea.vmem %s0, %s235
        %p237 = pneg %p54
        %p238 = pneg %p51
        %s239 = smul.u32 2, %s23
        %p240 = scmp.lt.s32.totalorder %s239, 1
        %s241 = scalar_select %p240, %s239, 1
        %s242 = smul.addr %s241, 2
        %s243 = scalar_lea.vmem %s1, %s242
        %p244 = pneg %p80
        %p245 = pneg %p77
        %p246 = pneg %p101
        %p247 = pneg %p98
        %p248 = pneg %p122
        %p249 = pneg %p119
        %p250 = pneg %p143
        %p251 = pneg %p140
        %p252 = pneg %p171
        %p253 = pneg %p168
        %s254 = sand.u32 %s158, 1
        %s255 = scalar_lea.sflag [#allocation3], %s254
        %s256 = sand.u32 %s158, 1
        %s257 = smul.addr %s256, 8
        %s258 = scalar_lea.vmem [#allocation2], %s257
        %s259 = smul.u32 2, %s23
        %p260 = scmp.lt.s32.totalorder %s24, 1
        %s261 = scalar_select %p260, %s24, 1
        %p262 = scmp.lt.s32.totalorder %s259, 1
        %s263 = scalar_select %p262, %s259, 1
        %s264 = smul.addr %s261, 2
        %s265 = sadd.s32 %s263, %s264
        %s266 = smul.addr %s265, 4
        %s267 = scalar_lea.vmem %s0, %s266
        %s268 = smul.u32 2, %s23
        %s269 = smul.u32 2, %s23
        %p270 = scmp.lt.s32.totalorder %s269, 1
        %s271 = scalar_select %p270, %s269, 1
        %s272 = smul.addr %s271, 2
        %s273 = scalar_lea.vmem %s1, %s272
        %s274 = smul.u32 2, %s23
        %s275 = smul.u32 2, %s23
        %v276 = vld [vmem:[%s267] sm:$0xff]
        %v277 = vld [vmem:[%s273] sm:$0xf]
        %v278 = vld [vmem:[%s3] sm:$0xff]
        %v279 = vld [vmem:[%s3 + $0x8] sm:$0xf]
        %v280 = vld [vmem:[%s4] sm:$0xff]
        %v281 = vld [vmem:[%s4 + $0x8] sm:$0xf]
        %283 = vset.pattern.permute.xlu0 0
        %284 = vperm.xlu0 %283, %v278
        %v285 = vpop.permute.xlu0 %284
        %288 = vset.pattern.permute.xlu0 0
        %289 = vperm.xlu0 %288, %v279
        %v290 = vpop.permute.xlu0 %289
        %v293 = vlaneseq
        %v294 = vshrl.u32 %v293, 7
        %v295 = vsub.s32 0, %v294
        %v296 = vrot.slane %v277, %v295
        %v297 = vlaneseq
        %v298 = vshrl.u32 %v297, 7
        %v299 = vsub.s32 2, %v298
        %v300 = vrot.slane %v277, %v299
        %v303 = vlaneseq
        %v304 = vshrl.u32 %v303, 7
        %v305 = vsub.s32 0, %v304
        %v306 = vrot.slane %v296, %v305
        %v307 = vlaneseq
        %v308 = vshrl.u32 %v307, 7
        %v309 = vsub.s32 0, %v308
        %v310 = vrot.slane %v300, %v309
        %v311 = vmul.f32 %v285, %v306
        %v312 = vmul.f32 %v285, %v310
        %v313 = vmul.f32 %v290, %v306
        %v314 = vmul.f32 %v290, %v310
        %316 = vset.pattern.permute.xlu0 0
        %317 = vperm.xlu0 %316, %v280
        %v318 = vpop.permute.xlu0 %317
        %321 = vset.pattern.permute.xlu0 0
        %322 = vperm.xlu0 %321, %v281
        %v323 = vpop.permute.xlu0 %322
        %v325 = vadd.f32 %v318, %v311
        %v326 = vadd.f32 %v318, %v312
        %v327 = vadd.f32 %v323, %v313
        %v328 = vadd.f32 %v323, %v314
        %329 = vset.pattern.permute.xlu0 1
        %330 = vperm.xlu0 %329, %v278
        %v331 = vpop.permute.xlu0 %330
        %333 = vset.pattern.permute.xlu0 1
        %334 = vperm.xlu0 %333, %v279
        %v335 = vpop.permute.xlu0 %334
        %v337 = vlaneseq
        %v338 = vshrl.u32 %v337, 7
        %v339 = vsub.s32 1, %v338
        %v340 = vrot.slane %v277, %v339
        %v341 = vlaneseq
        %v342 = vshrl.u32 %v341, 7
        %v343 = vsub.s32 3, %v342
        %v344 = vrot.slane %v277, %v343
        %v347 = vlaneseq
        %v348 = vshrl.u32 %v347, 7
        %v349 = vsub.s32 1, %v348
        %v350 = vrot.slane %v340, %v349
        %v351 = vlaneseq
        %v352 = vshrl.u32 %v351, 7
        %v353 = vsub.s32 1, %v352
        %v354 = vrot.slane %v344, %v353
        %v355 = vmul.f32 %v331, %v350
        %v356 = vmul.f32 %v331, %v354
        %v357 = vmul.f32 %v335, %v350
        %v358 = vmul.f32 %v335, %v354
        %v359 = vadd.f32 %v325, %v355
        %v360 = vadd.f32 %v326, %v356
        %v361 = vadd.f32 %v327, %v357
        %v362 = vadd.f32 %v328, %v358
        %v363 = vld [vmem:[%s2] sm:$0xff]
        %v364 = vld [vmem:[%s2 + $0x8] sm:$0xf]
        %366 = vset.pattern.permute.xlu0 0
        %367 = vperm.xlu0 %366, %v363
        %v368 = vpop.permute.xlu0 %367
        %371 = vset.pattern.permute.xlu0 0
        %372 = vperm.xlu0 %371, %v364
        %v373 = vpop.permute.xlu0 %372
        %v376 = vlaneseq
        %v377 = vshrl.u32 %v376, 7
        %v378 = vsub.s32 0, %v377
        %v379 = vrot.slane %v276, %v378
        %v380 = vlaneseq
        %v381 = vshrl.u32 %v380, 7
        %v382 = vsub.s32 4, %v381
        %v383 = vrot.slane %v276, %v382
        %v386 = vlaneseq
        %v387 = vshrl.u32 %v386, 7
        %v388 = vsub.s32 0, %v387
        %v389 = vrot.slane %v379, %v388
        %v390 = vlaneseq
        %v391 = vshrl.u32 %v390, 7
        %v392 = vsub.s32 0, %v391
        %v393 = vrot.slane %v383, %v392
        %v394 = vmul.f32 %v368, %v389
        %v395 = vmul.f32 %v368, %v393
        %v396 = vmul.f32 %v373, %v389
        %v397 = vmul.f32 %v373, %v393
        %v398 = vadd.f32 %v359, %v394
        %v399 = vadd.f32 %v360, %v395
        %v400 = vadd.f32 %v361, %v396
        %v401 = vadd.f32 %v362, %v397
        %402 = vset.pattern.permute.xlu0 1
        %403 = vperm.xlu0 %402, %v363
        %v404 = vpop.permute.xlu0 %403
        %406 = vset.pattern.permute.xlu0 1
        %407 = vperm.xlu0 %406, %v364
        %v408 = vpop.permute.xlu0 %407
        %v410 = vlaneseq
        %v411 = vshrl.u32 %v410, 7
        %v412 = vsub.s32 1, %v411
        %v413 = vrot.slane %v276, %v412
        %v414 = vlaneseq
        %v415 = vshrl.u32 %v414, 7
        %v416 = vsub.s32 5, %v415
        %v417 = vrot.slane %v276, %v416
        %v420 = vlaneseq
        %v421 = vshrl.u32 %v420, 7
        %v422 = vsub.s32 1, %v421
        %v423 = vrot.slane %v413, %v422
        %v424 = vlaneseq
        %v425 = vshrl.u32 %v424, 7
        %v426 = vsub.s32 1, %v425
        %v427 = vrot.slane %v417, %v426
        %v428 = vmul.f32 %v404, %v423
        %v429 = vmul.f32 %v404, %v427
        %v430 = vmul.f32 %v408, %v423
        %v431 = vmul.f32 %v408, %v427
        %v432 = vadd.f32 %v398, %v428
        %v433 = vadd.f32 %v399, %v429
        %v434 = vadd.f32 %v400, %v430
        %v435 = vadd.f32 %v401, %v431
        %436 = vset.pattern.permute.xlu0 2
        %437 = vperm.xlu0 %436, %v363
        %v438 = vpop.permute.xlu0 %437
        %440 = vset.pattern.permute.xlu0 2
        %441 = vperm.xlu0 %440, %v364
        %v442 = vpop.permute.xlu0 %441
        %v444 = vlaneseq
        %v445 = vshrl.u32 %v444, 7
        %v446 = vsub.s32 2, %v445
        %v447 = vrot.slane %v276, %v446
        %v448 = vlaneseq
        %v449 = vshrl.u32 %v448, 7
        %v450 = vsub.s32 6, %v449
        %v451 = vrot.slane %v276, %v450
        %v454 = vlaneseq
        %v455 = vshrl.u32 %v454, 7
        %v456 = vsub.s32 2, %v455
        %v457 = vrot.slane %v447, %v456
        %v458 = vlaneseq
        %v459 = vshrl.u32 %v458, 7
        %v460 = vsub.s32 2, %v459
        %v461 = vrot.slane %v451, %v460
        %v462 = vmul.f32 %v438, %v457
        %v463 = vmul.f32 %v438, %v461
        %v464 = vmul.f32 %v442, %v457
        %v465 = vmul.f32 %v442, %v461
        %v466 = vadd.f32 %v432, %v462
        %v467 = vadd.f32 %v433, %v463
        %v468 = vadd.f32 %v434, %v464
        %v469 = vadd.f32 %v435, %v465
        %470 = vset.pattern.permute.xlu0 3
        %471 = vperm.xlu0 %470, %v363
        %v472 = vpop.permute.xlu0 %471
        %474 = vset.pattern.permute.xlu0 3
        %475 = vperm.xlu0 %474, %v364
        %v476 = vpop.permute.xlu0 %475
        %v478 = vlaneseq
        %v479 = vshrl.u32 %v478, 7
        %v480 = vsub.s32 3, %v479
        %v481 = vrot.slane %v276, %v480
        %v482 = vlaneseq
        %v483 = vshrl.u32 %v482, 7
        %v484 = vsub.s32 7, %v483
        %v485 = vrot.slane %v276, %v484
        %v488 = vlaneseq
        %v489 = vshrl.u32 %v488, 7
        %v490 = vsub.s32 3, %v489
        %v491 = vrot.slane %v481, %v490
        %v492 = vlaneseq
        %v493 = vshrl.u32 %v492, 7
        %v494 = vsub.s32 3, %v493
        %v495 = vrot.slane %v485, %v494
        %v496 = vmul.f32 %v472, %v491
        %v497 = vmul.f32 %v472, %v495
        %v498 = vmul.f32 %v476, %v491
        %v499 = vmul.f32 %v476, %v495
        %v500 = vadd.f32 %v466, %v496
        %v501 = vadd.f32 %v467, %v497
        %v502 = vadd.f32 %v468, %v498
        %v503 = vadd.f32 %v469, %v499
        %v504 = vxor.u32 %v500, 2147483648
        %v505 = vxor.u32 %v501, 2147483648
        %v506 = vmul.f32 %v504, 1.442695
        %v507 = vpow.pop %v506
        %v508 = vmul.f32 %v505, 1.442695
        %v509 = vpow.pop %v508
        %v510 = vadd.f32 %v507, 1.0
        %v511 = vadd.f32 %v509, 1.0
        %v512 = vrcp.pop %v510
        %v513 = vmul.f32 1.0, %v512
        %v514 = vrcp.pop %v511
        %v515 = vmul.f32 1.0, %v514
        %v516 = vmul.f32 %v513, %v502
        %v517 = vmul.f32 %v515, %v503
        %v520 = vcombine.low %v516, %v517
        %522 = vst [vmem:[%s258] sm:$0xff] %v520
        %s523 = sand.u32 %s158, 1
        %s524 = scalar_lea.sflag [#allocation3], %s523
        %s525 = sand.u32 %s158, 1
        %s526 = smul.addr %s525, 8
        %s527 = scalar_lea.vmem [#allocation2], %s526
        // Predicated region
        $region41: #{tpu_custom_call.1} parent=39 // pred_check
          %p528 = pneg %p168
        $region42: #{tpu_custom_call.1} parent=39 // pred_check_branch
          %530 = sbr.rel (%p528) target = $region44
        $region43: #{tpu_custom_call.1} parent=39 // pred_region
          %s531 = smul.u32 2, %s23
          %s533 = ssub.s32 128, 128
          %534 = vsyncadd %s524, %s533
          %s535 = smul.addr %s24, 2
          %s536 = sadd.s32 %s531, %s535
          %s537 = smul.addr %s536, 64
          %s538 = scalar_lea.hbm %s5, %s537
          %s540 = sshll.u32 %s527, 4
          %s541 = int_to_ptr.vmem [resolvable:$true] %s540
          %543 = dma.vmem_to_hbm [thread:$0]  %s541, 128, %s538, %s524
        $region44: #{tpu_custom_call.1} parent=39 // pred_fallthru
          _
      $region40: #{tpu_custom_call.1} parent=5 // pred_fallthru
        _
      %p544 = scmp.le.s32.totalorder 2, %s14
      // Predicated region
      $region45: #{tpu_custom_call.1} parent=5 // pred_check
        %p545 = pneg %p544
      $region46: #{tpu_custom_call.1} parent=5 // pred_check_branch
        %547 = sbr.rel (%p545) target = $region48
      $region47: #{tpu_custom_call.1} parent=5 // pred_region
        %s548 = ssub.s32 %s14, 2
        // Predicated region
        $region49: #{tpu_custom_call.1} parent=47 // pred_check
          %p549 = pneg %p174
        $region50: #{tpu_custom_call.1} parent=47 // pred_check_branch
          %551 = sbr.rel (%p549) target = $region52
        $region51: #{tpu_custom_call.1} parent=47 // pred_region
          %s552 = sand.u32 %s159, 1
          %s553 = scalar_lea.sflag [#allocation3], %s552
          %s554 = sand.u32 %s159, 1
          %s555 = smul.addr %s554, 8
          %s556 = scalar_lea.vmem [#allocation2], %s555
          %557 = dma.done %s553, 128
        $region52: #{tpu_custom_call.1} parent=47 // pred_fallthru
          _
      $region48: #{tpu_custom_call.1} parent=5 // pred_fallthru
        _
    $region6: #{tpu_custom_call.1} parent=1 // loop_footer
      %s18 = sadd.s32 1, %s14
    $region7: #{tpu_custom_call.1} parent=1 // loop_footer_branch
      %13 = sbr.rel target = $region3
    $region8: #{tpu_custom_call.1} parent=1 // loop_exit
      _
    %558 = vsyncpa [#allocation3], 1
    %s559 = scalar_lea.sflag [#allocation3], 1
    %560 = vsyncpa %s559, 1

</llo_original>
